<compile_context>
chip_gen: v7x
topology: tpu7x:2x2x1
jax: 0.10.0
libtpu: 0.0.40
codegen_flags: <defaults>
</compile_context>

<pallas_src>
import jax
import jax.numpy as jnp
from jax.experimental import pallas as pl
from jax.experimental.pallas import tpu as pltpu

ATTR_ORDER = [
    "object_color_equal",
    "object_size_bigger",
    "object_size_smaller",
    "room_size_bigger",
    "room_size_smaller",
    "object_dist_farther",
    "object_dist_closer",
]
NUM_ATTR_TYPES = len(ATTR_ORDER)


# ---------------------------------------------------------------------------
# Fused kernel.  Grid = (P,) where P = number of attr types present in the batch.
#   pids_ref     : (P,) int32 SMEM (scalar prefetch) — attr id per grid step (drives
#                  the w1/b1 index_maps; unused in the body).
#   x3_ref       : (3n, img_dim)   rows laid out as [row0 of all; row1 of all; row2 of all]
#   pos_ids_ref  : (n, 1) int32    position of each sample's attr within the present list
#   is_dist_ref  : (n, 1) int32    1 iff attr is 'object_dist_*'
#   cnn_w_ref    : (img_dim, fc_dim), cnn_b_ref: (1, fc_dim)
#   w1_ref       : (1, 2*fc_dim, fc_dim)  — ONLY the current attr's block (DMAed per step)
#   b1_ref       : (1, 1, fc_dim)
#   w2_ref       : (fc_dim, N_PAD)  — all attrs' answer columns packed lane-dense
#   b2_ref       : (1, N_PAD)
#   out_ref      : (n, N_PAD)
#   scratch      : x_all (n, 2*fc_dim), h_acc (n, fc_dim)
# ---------------------------------------------------------------------------
def fused_vqa_kernel(pids_ref, x3_ref, pos_ids_ref, is_dist_ref,
                     cnn_w_ref, cnn_b_ref, w1_ref, b1_ref, w2_ref, b2_ref,
                     out_ref, x_all_scr, h_acc_scr):
    del pids_ref  # only consumed by the index_maps
    p = pl.program_id(0)
    n = out_ref.shape[0]

    # --- step 0: cnn_fc_layer + feature filtering, kept in VMEM scratch -----------
    @pl.when(p == 0)
    def _prologue():
        feats = jnp.dot(x3_ref[...], cnn_w_ref[...],
                        preferred_element_type=jnp.float32)
        feats = jnp.maximum(feats + cnn_b_ref[...], 0.0)          # (3n, fc_dim)
        f0 = feats[0:n, :]
        f1 = feats[n:2 * n, :]
        f2 = feats[2 * n:3 * n, :]
        is_dist = is_dist_ref[...] == 1                           # (n, 1) bool
        a = jnp.where(is_dist, f0 * f1, f0)
        b = jnp.where(is_dist, f1 * f2, f1)
        x_all_scr[...] = jnp.concatenate([a, b], axis=1)          # (n, 2*fc_dim)
        h_acc_scr[...] = jnp.zeros_like(h_acc_scr)

    # --- current present attr: first head layer on all samples, masked accumulate --
    h = jnp.dot(x_all_scr[...], w1_ref[0],
                preferred_element_type=jnp.float32) + b1_ref[0]
    h = jnp.maximum(h, 0.0)                                       # (n, fc_dim)
    rowmask = pos_ids_ref[...] == p                               # (n, 1) bool
    h_acc_scr[...] = h_acc_scr[...] + jnp.where(rowmask, h, 0.0)

    # --- last step: ONE second-layer dot against the packed w2 slab ---------------
    @pl.when(p == pl.num_programs(0) - 1)
    def _epilogue():
        s = jnp.dot(h_acc_scr[...], w2_ref[...],
                    preferred_element_type=jnp.float32) + b2_ref[...]
        out_ref[...] = s.astype(out_ref.dtype)                    # lane-dense store


# ---------------------------------------------------------------------------
# One-time parameter preprocessing (hoisted out of the per-call wrapper).
# ---------------------------------------------------------------------------
def prepare_params(params):
    fc_dim = params["cnn_w"].shape[1]
    num_answers = params["w2"].shape[-1]
    total = NUM_ATTR_TYPES * num_answers
    n_pad = max(128, ((total + 127) // 128) * 128)
    # Pack every attr's (fc_dim, num_answers) weight into one lane-dense slab:
    # columns [k*na : (k+1)*na] hold attr k.  Built once, reused for every forward.
    w2_slab = jnp.zeros((fc_dim, n_pad), jnp.float32)
    w2_slab = w2_slab.at[:, :total].set(
        jnp.transpose(params["w2"], (1, 0, 2)).reshape(fc_dim, total))
    b2_slab = jnp.zeros((1, n_pad), jnp.float32)
    b2_slab = b2_slab.at[:, :total].set(params["b2"].reshape(1, total))
    prepared = dict(params)
    prepared["w2_slab"] = w2_slab
    prepared["b2_slab"] = b2_slab
    prepared["n_pad"] = n_pad
    prepared["num_answers"] = num_answers
    return prepared


# ---------------------------------------------------------------------------
# Per-call wrapper.
# ---------------------------------------------------------------------------
def modular_attribute_vqa(img_feats, attrs, prepared):
    """img_feats: (n, max_num_inputs, img_feat_dim) float32; attrs: list[str]."""
    n, max_in, img_dim = img_feats.shape
    assert max_in >= 3, "heads read up to 3 input rows per sample"
    fc_dim = prepared["cnn_w"].shape[1]
    num_answers = prepared["num_answers"]
    n_pad = prepared["n_pad"]

    # attrs is trace-time static -> all selection bookkeeping is static.
    attr_ids_list = [ATTR_ORDER.index(a) for a in attrs]
    present_ids = sorted(set(attr_ids_list))                  # static
    P = len(present_ids)
    pids = jnp.asarray(present_ids, jnp.int32)                # (P,) scalar-prefetch
    pos_ids = jnp.asarray([present_ids.index(k) for k in attr_ids_list],
                          jnp.int32).reshape(n, 1)
    is_dist = jnp.asarray([1 if "object_dist" in a else 0 for a in attrs],
                          jnp.int32).reshape(n, 1)

    # Only rows 0..2 per sample feed the heads; lay out as (3n, img_dim) so the kernel
    # can take plain leading-dim slices (row0-block / row1-block / row2-block).
    x3 = jnp.transpose(img_feats[:, :3, :], (1, 0, 2)).reshape(3 * n, img_dim)

    grid_spec = pltpu.PrefetchScalarGridSpec(
        num_scalar_prefetch=1,
        grid=(P,),
        in_specs=[
            pl.BlockSpec((3 * n, img_dim), lambda p, pids: (0, 0)),          # x3
            pl.BlockSpec((n, 1), lambda p, pids: (0, 0)),                    # pos_ids
            pl.BlockSpec((n, 1), lambda p, pids: (0, 0)),                    # is_dist
            pl.BlockSpec((img_dim, fc_dim), lambda p, pids: (0, 0)),         # cnn_w
            pl.BlockSpec((1, fc_dim), lambda p, pids: (0, 0)),               # cnn_b
            pl.BlockSpec((1, 2 * fc_dim, fc_dim),
                         lambda p, pids: (pids[p], 0, 0)),                   # w1 block
            pl.BlockSpec((1, 1, fc_dim), lambda p, pids: (pids[p], 0, 0)),   # b1 block
            pl.BlockSpec((fc_dim, n_pad), lambda p, pids: (0, 0)),           # w2 slab
            pl.BlockSpec((1, n_pad), lambda p, pids: (0, 0)),                # b2 slab
        ],
        out_specs=pl.BlockSpec((n, n_pad), lambda p, pids: (0, 0)),
        scratch_shapes=[
            pltpu.VMEM((n, 2 * fc_dim), jnp.float32),   # filtered features
            pltpu.VMEM((n, fc_dim), jnp.float32),       # selected hidden activations
        ],
    )

    out = pl.pallas_call(
        fused_vqa_kernel,
        out_shape=jax.ShapeDtypeStruct((n, n_pad), jnp.float32),
        grid_spec=grid_spec,
        compiler_params=pltpu.CompilerParams(
            dimension_semantics=("arbitrary",),
            vmem_limit_bytes=32 * 1024 * 1024,
        ),
    )(pids, x3, pos_ids, is_dist,
      prepared["cnn_w"], prepared["cnn_b"], prepared["w1"], prepared["b1"],
      prepared["w2_slab"], prepared["b2_slab"])

    # Static per-sample selection of that sample's attr's answer columns.
    col_idx = jnp.asarray(
        [[k * num_answers + j for j in range(num_answers)] for k in attr_ids_list],
        jnp.int32)                                            # (n, num_answers)
    return jnp.take_along_axis(out, col_idx, axis=1)


# ---------------------------------------------------------------------------
# Pure-JAX reference (mirrors the PyTorch forward, eval mode)
# ---------------------------------------------------------------------------
def reference_forward(img_feats, attrs, params):
    feats = jax.nn.relu(img_feats @ params["cnn_w"] + params["cnn_b"][0])
    scores = []
    for i, a in enumerate(attrs):
        if "object_dist" in a:
            filt = jnp.concatenate(
                [feats[i, 0:1] * feats[i, 1:2], feats[i, 1:2] * feats[i, 2:3]], 0)
        else:
            filt = feats[i, :2]
        x = filt.reshape(1, -1)
        k = ATTR_ORDER.index(a)
        h = jax.nn.relu(x @ params["w1"][k] + params["b1"][k, 0])
        s = h @ params["w2"][k] + params["b2"][k, 0]
        scores.append(s)
    return jnp.concatenate(scores, 0)


# ---------------------------------------------------------------------------
# Deterministic parameter construction
# ---------------------------------------------------------------------------
def make_params(key, img_feat_dim, fc_dim, num_answers):
    ks = jax.random.split(key, 6)
    scale = 0.02
    return {
        "cnn_w": scale * jax.random.normal(ks[0], (img_feat_dim, fc_dim), jnp.float32),
        "cnn_b": scale * jax.random.normal(ks[1], (1, fc_dim), jnp.float32),
        # stacked attr-specific MLPs (use_cube=False => every attr takes 2 inputs)
        "w1": scale * jax.random.normal(
            ks[2], (NUM_ATTR_TYPES, 2 * fc_dim, fc_dim), jnp.float32),
        "b1": scale * jax.random.normal(
            ks[3], (NUM_ATTR_TYPES, 1, fc_dim), jnp.float32),
        "w2": scale * jax.random.normal(
            ks[4], (NUM_ATTR_TYPES, fc_dim, num_answers), jnp.float32),
        "b2": scale * jax.random.normal(
            ks[5], (NUM_ATTR_TYPES, 1, num_answers), jnp.float32),
    }


if __name__ == "__main__":
    # Small shapes consistent with the module's forward:
    #   img_feats: (n, max_num_inputs=8, img_feat_dim)
    n, max_in, img_feat_dim, fc_dim, num_answers = 4, 8, 256, 128, 2

    key = jax.random.PRNGKey(0)
    k_params, k_feats = jax.random.split(key)
    params = make_params(k_params, img_feat_dim, fc_dim, num_answers)
    prepared = prepare_params(params)          # one-time weight packing (hoisted)
    img_feats = jax.random.normal(k_feats, (n, max_in, img_feat_dim), jnp.float32)

    attrs = ["object_color_equal", "object_dist_farther",
             "room_size_bigger", "object_dist_closer"]

    scores = modular_attribute_vqa(img_feats, attrs, prepared)
    scores = jax.block_until_ready(scores)

    ref = jax.block_until_ready(reference_forward(img_feats, attrs, params))
    assert scores.shape == (n, num_answers)
    assert jnp.allclose(scores, ref, atol=1e-4, rtol=1e-4), (scores, ref)

    print("KERNEL_OK")
</pallas_src>

<mosaic_0001>
module attributes {stable_mosaic.version = 11 : i64} {
  func.func @fused_vqa_kernel(%arg0: i32, %arg1: memref<4xi32, #tpu.memory_space<smem>>, %arg2: memref<12x256xf32, #tpu.memory_space<vmem>>, %arg3: memref<4x1xi32, #tpu.memory_space<vmem>>, %arg4: memref<4x1xi32, #tpu.memory_space<vmem>>, %arg5: memref<256x128xf32, #tpu.memory_space<vmem>>, %arg6: memref<1x128xf32, #tpu.memory_space<vmem>>, %arg7: memref<1x256x128xf32, #tpu.memory_space<vmem>>, %arg8: memref<1x1x128xf32, #tpu.memory_space<vmem>>, %arg9: memref<128x128xf32, #tpu.memory_space<vmem>>, %arg10: memref<1x128xf32, #tpu.memory_space<vmem>>, %arg11: memref<4x128xf32, #tpu.memory_space<vmem>>, %arg12: memref<4x256xf32, #tpu.memory_space<vmem>>, %arg13: memref<4x128xf32, #tpu.memory_space<vmem>>) attributes {dimension_semantics = [#tpu.dimension_semantics<arbitrary>], iteration_bounds = array<i64: 4>, scalar_prefetch = 1 : i64, scratch_operands = 2 : i64, tpu.core_type = #tpu.core_type<tc>, window_params = [{pipeline_mode = #tpu.pipeline_mode<synchronous>, transform_indices = @transform_0, window_bounds = array<i64: 12, 256>}, {pipeline_mode = #tpu.pipeline_mode<synchronous>, transform_indices = @transform_1, window_bounds = array<i64: 4, 1>}, {pipeline_mode = #tpu.pipeline_mode<synchronous>, transform_indices = @transform_2, window_bounds = array<i64: 4, 1>}, {pipeline_mode = #tpu.pipeline_mode<synchronous>, transform_indices = @transform_3, window_bounds = array<i64: 256, 128>}, {pipeline_mode = #tpu.pipeline_mode<synchronous>, transform_indices = @transform_4, window_bounds = array<i64: 1, 128>}, {transform_indices = @transform_5, window_bounds = array<i64: 1, 256, 128>}, {transform_indices = @transform_6, window_bounds = array<i64: 1, 1, 128>}, {pipeline_mode = #tpu.pipeline_mode<synchronous>, transform_indices = @transform_7, window_bounds = array<i64: 128, 128>}, {pipeline_mode = #tpu.pipeline_mode<synchronous>, transform_indices = @transform_8, window_bounds = array<i64: 1, 128>}, {pipeline_mode = #tpu.pipeline_mode<synchronous>, transform_indices = @transform_9, window_bounds = array<i64: 4, 128>}]} {
    %c0_i32 = arith.constant 0 : i32
    %0 = arith.cmpi eq, %arg0, %c0_i32 : i32
    %1 = arith.extui %0 : i1 to i32
    %c0_i32_0 = arith.constant 0 : i32
    %2 = arith.cmpi ne, %1, %c0_i32_0 : i32
    scf.if %2 {
      %c0_17 = arith.constant 0 : index
      %c0_18 = arith.constant 0 : index
      %26 = vector.load %arg2[%c0_17, %c0_18] : memref<12x256xf32, #tpu.memory_space<vmem>>, vector<12x256xf32>
      %c0_19 = arith.constant 0 : index
      %c0_20 = arith.constant 0 : index
      %27 = vector.load %arg5[%c0_19, %c0_20] : memref<256x128xf32, #tpu.memory_space<vmem>>, vector<256x128xf32>
      %cst_21 = arith.constant dense<0.000000e+00> : vector<12x128xf32>
      %28 = tpu.matmul %26, %27, %cst_21 {dimension_numbers = #tpu.dot_dimension_numbers<[1], [0], [0], [1], [0, 0, 1, 1], [], []>} : vector<12x256xf32>, vector<256x128xf32>, vector<12x128xf32> -> vector<12x128xf32>
      %c0_22 = arith.constant 0 : index
      %c0_23 = arith.constant 0 : index
      %29 = vector.load %arg6[%c0_22, %c0_23] : memref<1x128xf32, #tpu.memory_space<vmem>>, vector<1x128xf32>
      %30 = vector.broadcast %29 : vector<1x128xf32> to vector<12x128xf32>
      %31 = arith.addf %28, %30 : vector<12x128xf32>
      %cst_24 = arith.constant 0.000000e+00 : f32
      %32 = vector.broadcast %cst_24 : f32 to vector<12x128xf32>
      %33 = arith.maximumf %31, %32 : vector<12x128xf32>
      %34 = vector.extract_strided_slice %33 {offsets = [0, 0], sizes = [4, 128], strides = [1, 1]} : vector<12x128xf32> to vector<4x128xf32>
      %35 = vector.extract_strided_slice %33 {offsets = [4, 0], sizes = [4, 128], strides = [1, 1]} : vector<12x128xf32> to vector<4x128xf32>
      %36 = vector.extract_strided_slice %33 {offsets = [8, 0], sizes = [4, 128], strides = [1, 1]} : vector<12x128xf32> to vector<4x128xf32>
      %c0_25 = arith.constant 0 : index
      %c0_26 = arith.constant 0 : index
      %37 = vector.load %arg4[%c0_25, %c0_26] : memref<4x1xi32, #tpu.memory_space<vmem>>, vector<4x1xi32>
      %c1_i32 = arith.constant 1 : i32
      %38 = vector.broadcast %c1_i32 : i32 to vector<4x1xi32>
      %39 = arith.cmpi eq, %37, %38 : vector<4x1xi32>
      %40 = arith.mulf %34, %35 : vector<4x128xf32>
      %41 = vector.shape_cast %39 : vector<4x1xi1> to vector<4x1xi1>
      %42 = vector.broadcast %41 : vector<4x1xi1> to vector<4x128xi1>
      %43 = arith.select %42, %40, %34 : vector<4x128xi1>, vector<4x128xf32>
      %44 = arith.mulf %35, %36 : vector<4x128xf32>
      %45 = vector.shape_cast %39 : vector<4x1xi1> to vector<4x1xi1>
      %46 = vector.broadcast %45 : vector<4x1xi1> to vector<4x128xi1>
      %47 = arith.select %46, %44, %35 : vector<4x128xi1>, vector<4x128xf32>
      %48 = tpu.concatenate %43, %47 in 1 : vector<4x128xf32>, vector<4x128xf32> -> vector<4x256xf32>
      %c0_27 = arith.constant 0 : index
      %c0_28 = arith.constant 0 : index
      %49 = vector.load %arg12[%c0_27, %c0_28] : memref<4x256xf32, #tpu.memory_space<vmem>>, vector<4x256xf32>
      tpu.vector_store %arg12[%c0_27, %c0_28], %48 {strides = array<i32>} : memref<4x256xf32, #tpu.memory_space<vmem>>, vector<4x256xf32>,
      %cst_29 = arith.constant 0.000000e+00 : f32
      %50 = vector.broadcast %cst_29 : f32 to vector<4x128xf32>
      %c0_30 = arith.constant 0 : index
      %c0_31 = arith.constant 0 : index
      %51 = vector.load %arg13[%c0_30, %c0_31] : memref<4x128xf32, #tpu.memory_space<vmem>>, vector<4x128xf32>
      tpu.vector_store %arg13[%c0_30, %c0_31], %50 {strides = array<i32>} : memref<4x128xf32, #tpu.memory_space<vmem>>, vector<4x128xf32>,
    } else {
    }
    %c0 = arith.constant 0 : index
    %c0_1 = arith.constant 0 : index
    %3 = vector.load %arg12[%c0, %c0_1] : memref<4x256xf32, #tpu.memory_space<vmem>>, vector<4x256xf32>
    %c0_2 = arith.constant 0 : index
    %c0_3 = arith.constant 0 : index
    %c0_4 = arith.constant 0 : index
    %4 = vector.load %arg7[%c0_2, %c0_3, %c0_4] : memref<1x256x128xf32, #tpu.memory_space<vmem>>, vector<1x256x128xf32>
    %5 = vector.shape_cast %4 : vector<1x256x128xf32> to vector<256x128xf32>
    %cst = arith.constant dense<0.000000e+00> : vector<4x128xf32>
    %6 = tpu.matmul %3, %5, %cst {dimension_numbers = #tpu.dot_dimension_numbers<[1], [0], [0], [1], [0, 0, 1, 1], [], []>} : vector<4x256xf32>, vector<256x128xf32>, vector<4x128xf32> -> vector<4x128xf32>
    %c0_5 = arith.constant 0 : index
    %c0_6 = arith.constant 0 : index
    %c0_7 = arith.constant 0 : index
    %7 = vector.load %arg8[%c0_5, %c0_6, %c0_7] : memref<1x1x128xf32, #tpu.memory_space<vmem>>, vector<1x1x128xf32>
    %8 = vector.shape_cast %7 : vector<1x1x128xf32> to vector<1x128xf32>
    %9 = vector.broadcast %8 : vector<1x128xf32> to vector<4x128xf32>
    %10 = arith.addf %6, %9 : vector<4x128xf32>
    %cst_8 = arith.constant 0.000000e+00 : f32
    %11 = vector.broadcast %cst_8 : f32 to vector<4x128xf32>
    %12 = arith.maximumf %10, %11 : vector<4x128xf32>
    %c0_9 = arith.constant 0 : index
    %c0_10 = arith.constant 0 : index
    %13 = vector.load %arg3[%c0_9, %c0_10] : memref<4x1xi32, #tpu.memory_space<vmem>>, vector<4x1xi32>
    %14 = vector.broadcast %arg0 : i32 to vector<4x1xi32>
    %15 = arith.cmpi eq, %13, %14 : vector<4x1xi32>
    %c0_11 = arith.constant 0 : index
    %c0_12 = arith.constant 0 : index
    %16 = vector.load %arg13[%c0_11, %c0_12] : memref<4x128xf32, #tpu.memory_space<vmem>>, vector<4x128xf32>
    %cst_13 = arith.constant 0.000000e+00 : f32
    %17 = vector.shape_cast %15 : vector<4x1xi1> to vector<4x1xi1>
    %18 = vector.broadcast %17 : vector<4x1xi1> to vector<4x128xi1>
    %19 = vector.broadcast %cst_13 : f32 to vector<4x128xf32>
    %20 = arith.select %18, %12, %19 : vector<4x128xi1>, vector<4x128xf32>
    %21 = arith.addf %16, %20 : vector<4x128xf32>
    %c0_14 = arith.constant 0 : index
    %c0_15 = arith.constant 0 : index
    %22 = vector.load %arg13[%c0_14, %c0_15] : memref<4x128xf32, #tpu.memory_space<vmem>>, vector<4x128xf32>
    tpu.vector_store %arg13[%c0_14, %c0_15], %21 {strides = array<i32>} : memref<4x128xf32, #tpu.memory_space<vmem>>, vector<4x128xf32>,
    %c3_i32 = arith.constant 3 : i32
    %23 = arith.cmpi eq, %arg0, %c3_i32 : i32
    %24 = arith.extui %23 : i1 to i32
    %c0_i32_16 = arith.constant 0 : i32
    %25 = arith.cmpi ne, %24, %c0_i32_16 : i32
    scf.if %25 {
      %c0_17 = arith.constant 0 : index
      %c0_18 = arith.constant 0 : index
      %26 = vector.load %arg13[%c0_17, %c0_18] : memref<4x128xf32, #tpu.memory_space<vmem>>, vector<4x128xf32>
      %c0_19 = arith.constant 0 : index
      %c0_20 = arith.constant 0 : index
      %27 = vector.load %arg9[%c0_19, %c0_20] : memref<128x128xf32, #tpu.memory_space<vmem>>, vector<128x128xf32>
      %cst_21 = arith.constant dense<0.000000e+00> : vector<4x128xf32>
      %28 = tpu.matmul %26, %27, %cst_21 {dimension_numbers = #tpu.dot_dimension_numbers<[1], [0], [0], [1], [0, 0, 1, 1], [], []>} : vector<4x128xf32>, vector<128x128xf32>, vector<4x128xf32> -> vector<4x128xf32>
      %c0_22 = arith.constant 0 : index
      %c0_23 = arith.constant 0 : index
      %29 = vector.load %arg10[%c0_22, %c0_23] : memref<1x128xf32, #tpu.memory_space<vmem>>, vector<1x128xf32>
      %30 = vector.broadcast %29 : vector<1x128xf32> to vector<4x128xf32>
      %31 = arith.addf %28, %30 : vector<4x128xf32>
      %c0_24 = arith.constant 0 : index
      %c0_25 = arith.constant 0 : index
      %32 = vector.load %arg11[%c0_24, %c0_25] : memref<4x128xf32, #tpu.memory_space<vmem>>, vector<4x128xf32>
      tpu.vector_store %arg11[%c0_24, %c0_25], %31 {strides = array<i32>} : memref<4x128xf32, #tpu.memory_space<vmem>>, vector<4x128xf32>,
    } else {
    }
    return
  }
  func.func @transform_0(%arg0: i32, %arg1: memref<4xi32, #tpu.memory_space<smem>>) -> (i32, i32) {
    %c0_i32 = arith.constant 0 : i32
    %c0_i32_0 = arith.constant 0 : i32
    %c0_i32_1 = arith.constant 0 : i32
    return %c0_i32, %c0_i32_0 : i32, i32
  }
  func.func @transform_1(%arg0: i32, %arg1: memref<4xi32, #tpu.memory_space<smem>>) -> (i32, i32) {
    %c0_i32 = arith.constant 0 : i32
    %c0_i32_0 = arith.constant 0 : i32
    %c0_i32_1 = arith.constant 0 : i32
    return %c0_i32, %c0_i32_0 : i32, i32
  }
  func.func @transform_2(%arg0: i32, %arg1: memref<4xi32, #tpu.memory_space<smem>>) -> (i32, i32) {
    %c0_i32 = arith.constant 0 : i32
    %c0_i32_0 = arith.constant 0 : i32
    %c0_i32_1 = arith.constant 0 : i32
    return %c0_i32, %c0_i32_0 : i32, i32
  }
  func.func @transform_3(%arg0: i32, %arg1: memref<4xi32, #tpu.memory_space<smem>>) -> (i32, i32) {
    %c0_i32 = arith.constant 0 : i32
    %c0_i32_0 = arith.constant 0 : i32
    %c0_i32_1 = arith.constant 0 : i32
    return %c0_i32, %c0_i32_0 : i32, i32
  }
  func.func @transform_4(%arg0: i32, %arg1: memref<4xi32, #tpu.memory_space<smem>>) -> (i32, i32) {
    %c0_i32 = arith.constant 0 : i32
    %c0_i32_0 = arith.constant 0 : i32
    %c0_i32_1 = arith.constant 0 : i32
    return %c0_i32, %c0_i32_0 : i32, i32
  }
  func.func @transform_5(%arg0: i32, %arg1: memref<4xi32, #tpu.memory_space<smem>>) -> (i32, i32, i32) {
    %0 = arith.index_cast %arg0 : i32 to index
    %1 = memref.load %arg1[%0] : memref<4xi32, #tpu.memory_space<smem>>
    %c0_i32 = arith.constant 0 : i32
    %c0_i32_0 = arith.constant 0 : i32
    %c0_i32_1 = arith.constant 0 : i32
    return %1, %c0_i32, %c0_i32_0 : i32, i32, i32
  }
  func.func @transform_6(%arg0: i32, %arg1: memref<4xi32, #tpu.memory_space<smem>>) -> (i32, i32, i32) {
    %0 = arith.index_cast %arg0 : i32 to index
    %1 = memref.load %arg1[%0] : memref<4xi32, #tpu.memory_space<smem>>
    %c0_i32 = arith.constant 0 : i32
    %c0_i32_0 = arith.constant 0 : i32
    %c0_i32_1 = arith.constant 0 : i32
    return %1, %c0_i32, %c0_i32_0 : i32, i32, i32
  }
  func.func @transform_7(%arg0: i32, %arg1: memref<4xi32, #tpu.memory_space<smem>>) -> (i32, i32) {
    %c0_i32 = arith.constant 0 : i32
    %c0_i32_0 = arith.constant 0 : i32
    %c0_i32_1 = arith.constant 0 : i32
    return %c0_i32, %c0_i32_0 : i32, i32
  }
  func.func @transform_8(%arg0: i32, %arg1: memref<4xi32, #tpu.memory_space<smem>>) -> (i32, i32) {
    %c0_i32 = arith.constant 0 : i32
    %c0_i32_0 = arith.constant 0 : i32
    %c0_i32_1 = arith.constant 0 : i32
    return %c0_i32, %c0_i32_0 : i32, i32
  }
  func.func @transform_9(%arg0: i32, %arg1: memref<4xi32, #tpu.memory_space<smem>>) -> (i32, i32) {
    %c0_i32 = arith.constant 0 : i32
    %c0_i32_0 = arith.constant 0 : i32
    %c0_i32_1 = arith.constant 0 : i32
    return %c0_i32, %c0_i32_0 : i32, i32
  }
}

</mosaic_0001>

<llo_original>
// kernel: tpu_custom_call.1
$region0: #{tpu_custom_call.1}
  #allocation0 [shape = 'u32[]', space=smem, size = 0x4, offset = 0x4, fixed_abs, tag = 'smem constant byte address 0x4 - core index']
  #allocation1 [shape = 'u32[144,128]{1,0:T(1,128)}', space=vmem, size = 0x12000, scoped, tag = 'internal scratch']
  #allocation2 [shape = 'f32[4,256]{1,0:T(4,128)}', space=vmem, size = 0x1000, scoped, tag = 'scratch operand']
  #allocation3 [shape = 'f32[4,128]{1,0:T(4,128)}', space=vmem, size = 0x800, scoped, tag = 'scratch operand']
  #allocation4 [shape = 's32[1]{0}', space=sflag, size = 0x4, scoped, tag = 'scoped memory for tpu_custom_call.1']
  #allocation5 [shape = 'u8[512]{0}', space=smem, size = 0x200, scoped, tag = 'prefetched SMEM operand 0']
  %s0 = inlined_call_operand.vmem [shape: s32[4], index: 0, kind: input, shape index: {}]
  %s1 = inlined_call_operand.hbm [shape: f32[12,256], index: 1, kind: input, shape index: {}]
  %s2 = inlined_call_operand.vmem [shape: s32[4,1], index: 2, kind: input, shape index: {}]
  %s3 = inlined_call_operand.vmem [shape: s32[4,1], index: 3, kind: input, shape index: {}]
  %s4 = inlined_call_operand.hbm [shape: f32[256,128], index: 4, kind: input, shape index: {}]
  %s5 = inlined_call_operand.vmem [shape: f32[1,128], index: 5, kind: input, shape index: {}]
  %s6 = inlined_call_operand.hbm [shape: f32[7,256,128], index: 6, kind: input, shape index: {}]
  %s7 = inlined_call_operand.vmem [shape: f32[7,1,128], index: 7, kind: input, shape index: {}]
  %s8 = inlined_call_operand.hbm [shape: f32[128,128], index: 8, kind: input, shape index: {}]
  %s9 = inlined_call_operand.vmem [shape: f32[1,128], index: 9, kind: input, shape index: {}]
  %s10 = inlined_call_operand.hbm [shape: f32[4,128], index: 10, kind: output, shape index: {}]
  %s11 = sld [smem:[#allocation0]]
  $region93: #{tpu_custom_call.1} parent=0
    _
  %s13 = ssub.s32 1, %s11
  %s14 = scalar_select 0, %s13, %s11
  %s15 = sshll.u32 %s0, 4
  %s16 = int_to_ptr.vmem [resolvable:$true] %s15
  %18 = dma.vmem_to_smem %s16, 16, [#allocation5], [#allocation4]
  %19 = dma.done [#allocation4], 16
  %20 = sfence
  $region1: #{tpu_custom_call.1} parent=0
    #allocation6 [shape = 'u8[16384]{0}', space=vmem, size = 0x4000, scoped, tag = 'input window, operand 1, single buffered']
    #allocation7 [shape = 's32[2]{0}', space=sflag, size = 0x8, scoped, tag = 'scoped memory for tpu_custom_call.1']
    #allocation8 [shape = 's32[2]{0}', space=sflag, size = 0x8, scoped, tag = 'scoped memory for tpu_custom_call.1']
    #allocation9 [shape = 'u8[131072]{0}', space=vmem, size = 0x20000, scoped, tag = 'input window, operand 4, single buffered']
    #allocation10 [shape = 's32[1]{0}', space=sflag, size = 0x4, scoped, tag = 'scoped memory for tpu_custom_call.1']
    #allocation11 [shape = 'u8[262144]{0}', space=vmem, size = 0x40000, scoped, tag = 'input window, operand 6']
    #allocation12 [shape = 'u8[65536]{0}', space=vmem, size = 0x10000, scoped, tag = 'input window, operand 8, single buffered']
    #allocation13 [shape = 'u8[2048]{0}', space=vmem, size = 0x800, scoped, tag = 'output window, operand 0, single buffered']
    %21 = vsyncpa [#allocation7], 0
    %22 = vsyncpa [#allocation10], 0
    %23 = vsyncpa [#allocation8], 0
    loop: start=0, step=1, limit=6
    $region2: #{tpu_custom_call.1} parent=1 // loop_pre_header
      _
    $region3: #{tpu_custom_call.1} parent=1 // loop_header
      %s25 = sphi 0, %s29
      %p26 = scmp.ge.s32.totalorder %s25, 6
      %s33 = sphi 0, %s33
      %s35 = sphi 0, %s33
      %s36 = sphi 0, %s35
      %s50 = sphi 0, %s36
      %s54 = sphi 0, %s54
      %s56 = sphi 0, %s54
      %s57 = sphi 0, %s56
      %s71 = sphi 0, %s57
      %s75 = sphi 0, %s75
      %s77 = sphi 0, %s75
      %s78 = sphi 0, %s77
      %s92 = sphi 0, %s78
      %s96 = sphi 0, %s96
      %s98 = sphi 0, %s96
      %s99 = sphi 0, %s98
      %s113 = sphi 0, %s99
      %s117 = sphi 0, %s117
      %s119 = sphi 0, %s117
      %s120 = sphi 0, %s119
      %s134 = sphi 0, %s120
      %s142 = sphi 0, %s144
      %s145 = sphi 0, %s142
      %s146 = sphi 0, %s145
      %s162 = sphi 0, %s146
      %s170 = sphi 0, %s172
      %s173 = sphi 0, %s170
      %s174 = sphi 0, %s173
      %s190 = sphi 0, %s174
      %s194 = sphi 0, %s194
      %s196 = sphi 0, %s194
      %s197 = sphi 0, %s196
      %s211 = sphi 0, %s197
      %s215 = sphi 0, %s215
      %s217 = sphi 0, %s215
      %s218 = sphi 0, %s217
      %s232 = sphi 0, %s218
      %s236 = sphi 0, %s236
      %s238 = sphi 0, %s236
      %s239 = sphi 0, %s238
      %s253 = sphi 0, %s239
    $region4: #{tpu_custom_call.1} parent=1 // loop_header_branch
      %28 = sbr.rel (%p26) target = $region8
    $region5: #{tpu_custom_call.1} parent=1 // loop_body
      %s30 = ssub.s32 %s25, 1
      %s31 = ssub.s32 %s25, 2
      %s32 = sadd.s32 %s25, 1
      %s34 = sadd.s32 %s33, 1
      %p37 = scmp.eq.s32.totalorder %s25, 3
      %p38 = scmp.ne.s32.totalorder %s33, %s35
      %p39 = scmp.eq.s32.totalorder %s25, 0
      %p40 = por %p38, %p39
      %p41 = scmp.ne.s32.totalorder %s33, %s35
      %p42 = scmp.eq.s32.totalorder %s30, 3
      %p43 = por %p41, %p42
      %p44 = scmp.ne.s32.totalorder %s35, %s36
      %p45 = scmp.eq.s32.totalorder %s30, 0
      %p46 = por %p44, %p45
      %p47 = scmp.ne.s32.totalorder %s35, %s36
      %p48 = scmp.eq.s32.totalorder %s31, 3
      %p49 = por %p47, %p48
      %p51 = scmp.ne.s32.totalorder %s36, %s50
      %p52 = scmp.eq.s32.totalorder %s31, 0
      %p53 = por %p51, %p52
      %s55 = sadd.s32 %s54, 1
      %p58 = scmp.eq.s32.totalorder %s25, 3
      %p59 = scmp.ne.s32.totalorder %s54, %s56
      %p60 = scmp.eq.s32.totalorder %s25, 0
      %p61 = por %p59, %p60
      %p62 = scmp.ne.s32.totalorder %s54, %s56
      %p63 = scmp.eq.s32.totalorder %s30, 3
      %p64 = por %p62, %p63
      %p65 = scmp.ne.s32.totalorder %s56, %s57
      %p66 = scmp.eq.s32.totalorder %s30, 0
      %p67 = por %p65, %p66
      %p68 = scmp.ne.s32.totalorder %s56, %s57
      %p69 = scmp.eq.s32.totalorder %s31, 3
      %p70 = por %p68, %p69
      %p72 = scmp.ne.s32.totalorder %s57, %s71
      %p73 = scmp.eq.s32.totalorder %s31, 0
      %p74 = por %p72, %p73
      %s76 = sadd.s32 %s75, 1
      %p79 = scmp.eq.s32.totalorder %s25, 3
      %p80 = scmp.ne.s32.totalorder %s75, %s77
      %p81 = scmp.eq.s32.totalorder %s25, 0
      %p82 = por %p80, %p81
      %p83 = scmp.ne.s32.totalorder %s75, %s77
      %p84 = scmp.eq.s32.totalorder %s30, 3
      %p85 = por %p83, %p84
      %p86 = scmp.ne.s32.totalorder %s77, %s78
      %p87 = scmp.eq.s32.totalorder %s30, 0
      %p88 = por %p86, %p87
      %p89 = scmp.ne.s32.totalorder %s77, %s78
      %p90 = scmp.eq.s32.totalorder %s31, 3
      %p91 = por %p89, %p90
      %p93 = scmp.ne.s32.totalorder %s78, %s92
      %p94 = scmp.eq.s32.totalorder %s31, 0
      %p95 = por %p93, %p94
      %s97 = sadd.s32 %s96, 1
      %p100 = scmp.eq.s32.totalorder %s25, 3
      %p101 = scmp.ne.s32.totalorder %s96, %s98
      %p102 = scmp.eq.s32.totalorder %s25, 0
      %p103 = por %p101, %p102
      %p104 = scmp.ne.s32.totalorder %s96, %s98
      %p105 = scmp.eq.s32.totalorder %s30, 3
      %p106 = por %p104, %p105
      %p107 = scmp.ne.s32.totalorder %s98, %s99
      %p108 = scmp.eq.s32.totalorder %s30, 0
      %p109 = por %p107, %p108
      %p110 = scmp.ne.s32.totalorder %s98, %s99
      %p111 = scmp.eq.s32.totalorder %s31, 3
      %p112 = por %p110, %p111
      %p114 = scmp.ne.s32.totalorder %s99, %s113
      %p115 = scmp.eq.s32.totalorder %s31, 0
      %p116 = por %p114, %p115
      %s118 = sadd.s32 %s117, 1
      %p121 = scmp.eq.s32.totalorder %s25, 3
      %p122 = scmp.ne.s32.totalorder %s117, %s119
      %p123 = scmp.eq.s32.totalorder %s25, 0
      %p124 = por %p122, %p123
      %p125 = scmp.ne.s32.totalorder %s117, %s119
      %p126 = scmp.eq.s32.totalorder %s30, 3
      %p127 = por %p125, %p126
      %p128 = scmp.ne.s32.totalorder %s119, %s120
      %p129 = scmp.eq.s32.totalorder %s30, 0
      %p130 = por %p128, %p129
      %p131 = scmp.ne.s32.totalorder %s119, %s120
      %p132 = scmp.eq.s32.totalorder %s31, 3
      %p133 = por %p131, %p132
      %p135 = scmp.ne.s32.totalorder %s120, %s134
      %p136 = scmp.eq.s32.totalorder %s31, 0
      %p137 = por %p135, %p136
      %s138 = sld [smem:[#allocation5 + %s25]]
      %s139 = sld [smem:[#allocation5 + %s32]]
      %s140 = ssub.s32 %s138, %s139
      %p141 = scmp.eq.s32.totalorder %s140, 0
      %s143 = sadd.s32 %s142, 1
      %s144 = scalar_select %p141, %s142, %s143
      %p147 = pneg %p141
      %p148 = scmp.eq.s32.totalorder %s25, 3
      %p149 = por %p147, %p148
      %p150 = scmp.ne.s32.totalorder %s142, %s145
      %p151 = scmp.eq.s32.totalorder %s25, 0
      %p152 = por %p150, %p151
      %p153 = scmp.ne.s32.totalorder %s142, %s145
      %p154 = scmp.eq.s32.totalorder %s30, 3
      %p155 = por %p153, %p154
      %p156 = scmp.ne.s32.totalorder %s145, %s146
      %p157 = scmp.eq.s32.totalorder %s30, 0
      %p158 = por %p156, %p157
      %p159 = scmp.ne.s32.totalorder %s145, %s146
      %p160 = scmp.eq.s32.totalorder %s31, 3
      %p161 = por %p159, %p160
      %p163 = scmp.ne.s32.totalorder %s146, %s162
      %p164 = scmp.eq.s32.totalorder %s31, 0
      %p165 = por %p163, %p164
      %s166 = sld [smem:[#allocation5 + %s25]]
      %s167 = sld [smem:[#allocation5 + %s32]]
      %s168 = ssub.s32 %s166, %s167
      %p169 = scmp.eq.s32.totalorder %s168, 0
      %s171 = sadd.s32 %s170, 1
      %s172 = scalar_select %p169, %s170, %s171
      %p175 = pneg %p169
      %p176 = scmp.eq.s32.totalorder %s25, 3
      %p177 = por %p175, %p176
      %p178 = scmp.ne.s32.totalorder %s170, %s173
      %p179 = scmp.eq.s32.totalorder %s25, 0
      %p180 = por %p178, %p179
      %p181 = scmp.ne.s32.totalorder %s170, %s173
      %p182 = scmp.eq.s32.totalorder %s30, 3
      %p183 = por %p181, %p182
      %p184 = scmp.ne.s32.totalorder %s173, %s174
      %p185 = scmp.eq.s32.totalorder %s30, 0
      %p186 = por %p184, %p185
      %p187 = scmp.ne.s32.totalorder %s173, %s174
      %p188 = scmp.eq.s32.totalorder %s31, 3
      %p189 = por %p187, %p188
      %p191 = scmp.ne.s32.totalorder %s174, %s190
      %p192 = scmp.eq.s32.totalorder %s31, 0
      %p193 = por %p191, %p192
      %s195 = sadd.s32 %s194, 1
      %p198 = scmp.eq.s32.totalorder %s25, 3
      %p199 = scmp.ne.s32.totalorder %s194, %s196
      %p200 = scmp.eq.s32.totalorder %s25, 0
      %p201 = por %p199, %p200
      %p202 = scmp.ne.s32.totalorder %s194, %s196
      %p203 = scmp.eq.s32.totalorder %s30, 3
      %p204 = por %p202, %p203
      %p205 = scmp.ne.s32.totalorder %s196, %s197
      %p206 = scmp.eq.s32.totalorder %s30, 0
      %p207 = por %p205, %p206
      %p208 = scmp.ne.s32.totalorder %s196, %s197
      %p209 = scmp.eq.s32.totalorder %s31, 3
      %p210 = por %p208, %p209
      %p212 = scmp.ne.s32.totalorder %s197, %s211
      %p213 = scmp.eq.s32.totalorder %s31, 0
      %p214 = por %p212, %p213
      %s216 = sadd.s32 %s215, 1
      %p219 = scmp.eq.s32.totalorder %s25, 3
      %p220 = scmp.ne.s32.totalorder %s215, %s217
      %p221 = scmp.eq.s32.totalorder %s25, 0
      %p222 = por %p220, %p221
      %p223 = scmp.ne.s32.totalorder %s215, %s217
      %p224 = scmp.eq.s32.totalorder %s30, 3
      %p225 = por %p223, %p224
      %p226 = scmp.ne.s32.totalorder %s217, %s218
      %p227 = scmp.eq.s32.totalorder %s30, 0
      %p228 = por %p226, %p227
      %p229 = scmp.ne.s32.totalorder %s217, %s218
      %p230 = scmp.eq.s32.totalorder %s31, 3
      %p231 = por %p229, %p230
      %p233 = scmp.ne.s32.totalorder %s218, %s232
      %p234 = scmp.eq.s32.totalorder %s31, 0
      %p235 = por %p233, %p234
      %s237 = sadd.s32 %s236, 1
      %p240 = scmp.eq.s32.totalorder %s25, 3
      %p241 = scmp.ne.s32.totalorder %s236, %s238
      %p242 = scmp.eq.s32.totalorder %s25, 0
      %p243 = por %p241, %p242
      %p244 = scmp.ne.s32.totalorder %s236, %s238
      %p245 = scmp.eq.s32.totalorder %s30, 3
      %p246 = por %p244, %p245
      %p247 = scmp.ne.s32.totalorder %s238, %s239
      %p248 = scmp.eq.s32.totalorder %s30, 0
      %p249 = por %p247, %p248
      %p250 = scmp.ne.s32.totalorder %s238, %s239
      %p251 = scmp.eq.s32.totalorder %s31, 3
      %p252 = por %p250, %p251
      %p254 = scmp.ne.s32.totalorder %s239, %s253
      %p255 = scmp.eq.s32.totalorder %s31, 0
      %p256 = por %p254, %p255
      %p257 = scmp.le.s32.totalorder 1, %s25
      %p258 = scmp.lt.s32.totalorder %s25, 5
      %p259 = pnand %p257, %p258
      %p260 = pneg %p259
      // Predicated region
      $region9: #{tpu_custom_call.1} parent=5 // pred_check
        _
      $region10: #{tpu_custom_call.1} parent=5 // pred_check_branch
        %262 = sbr.rel (%p259) target = $region12
      $region11: #{tpu_custom_call.1} parent=5 // pred_region
        %s263 = ssub.s32 %s25, 1
        // Predicated region
        $region13: #{tpu_custom_call.1} parent=11 // pred_check
          %p264 = pneg %p46
        $region14: #{tpu_custom_call.1} parent=11 // pred_check_branch
          %266 = sbr.rel (%p264) target = $region16
        $region15: #{tpu_custom_call.1} parent=11 // pred_region
          %s268 = ssub.s32 512, 512
          %269 = vsyncadd [#allocation7], %s268
          %s270 = sshll.u32 [#allocation6], 4
          %s271 = int_to_ptr.vmem [resolvable:$true] %s270
          %276 = dma.hbm_to_vmem [thread:$0]  %s1, 512, %s271, [#allocation7], 256, 256, 16
        $region16: #{tpu_custom_call.1} parent=11 // pred_fallthru
          _
        // Predicated region
        $region17: #{tpu_custom_call.1} parent=11 // pred_check
          %p277 = pneg %p67
        $region18: #{tpu_custom_call.1} parent=11 // pred_check_branch
          %279 = sbr.rel (%p277) target = $region20
        $region19: #{tpu_custom_call.1} parent=11 // pred_region
          _
        $region20: #{tpu_custom_call.1} parent=11 // pred_fallthru
          _
        // Predicated region
        $region21: #{tpu_custom_call.1} parent=11 // pred_check
          %p280 = pneg %p88
        $region22: #{tpu_custom_call.1} parent=11 // pred_check_branch
          %282 = sbr.rel (%p280) target = $region24
        $region23: #{tpu_custom_call.1} parent=11 // pred_region
          _
        $region24: #{tpu_custom_call.1} parent=11 // pred_fallthru
          _
        // Predicated region
        $region25: #{tpu_custom_call.1} parent=11 // pred_check
          %p283 = pneg %p109
        $region26: #{tpu_custom_call.1} parent=11 // pred_check_branch
          %285 = sbr.rel (%p283) target = $region28
        $region27: #{tpu_custom_call.1} parent=11 // pred_region
          %s287 = ssub.s32 4096, 4096
          %288 = vsyncadd [#allocation10], %s287
          %s289 = sshll.u32 [#allocation9], 4
          %s290 = int_to_ptr.vmem [resolvable:$true] %s289
          %295 = dma.hbm_to_vmem [thread:$0]  %s4, 4096, %s290, [#allocation10], 128, 128, 8
        $region28: #{tpu_custom_call.1} parent=11 // pred_fallthru
          _
        // Predicated region
        $region29: #{tpu_custom_call.1} parent=11 // pred_check
          %p296 = pneg %p130
        $region30: #{tpu_custom_call.1} parent=11 // pred_check_branch
          %298 = sbr.rel (%p296) target = $region32
        $region31: #{tpu_custom_call.1} parent=11 // pred_region
          _
        $region32: #{tpu_custom_call.1} parent=11 // pred_fallthru
          _
        // Predicated region
        $region33: #{tpu_custom_call.1} parent=11 // pred_check
          %p299 = pneg %p207
        $region34: #{tpu_custom_call.1} parent=11 // pred_check_branch
          %301 = sbr.rel (%p299) target = $region36
        $region35: #{tpu_custom_call.1} parent=11 // pred_region
          %s303 = ssub.s32 2048, 2048
          %304 = vsyncadd [#allocation10], %s303
          %s305 = sshll.u32 [#allocation12], 4
          %s306 = int_to_ptr.vmem [resolvable:$true] %s305
          %311 = dma.hbm_to_vmem [thread:$0]  %s8, 2048, %s306, [#allocation10], 128, 128, 8
        $region36: #{tpu_custom_call.1} parent=11 // pred_fallthru
          _
        // Predicated region
        $region37: #{tpu_custom_call.1} parent=11 // pred_check
          %p312 = pneg %p228
        $region38: #{tpu_custom_call.1} parent=11 // pred_check_branch
          %314 = sbr.rel (%p312) target = $region40
        $region39: #{tpu_custom_call.1} parent=11 // pred_region
          _
        $region40: #{tpu_custom_call.1} parent=11 // pred_fallthru
          _
      $region12: #{tpu_custom_call.1} parent=5 // pred_fallthru
        _
      %p315 = scmp.lt.s32.totalorder %s25, 4
      // Predicated region
      $region41: #{tpu_custom_call.1} parent=5 // pred_check
        %p316 = pneg %p315
      $region42: #{tpu_custom_call.1} parent=5 // pred_check_branch
        %318 = sbr.rel (%p316) target = $region44
      $region43: #{tpu_custom_call.1} parent=5 // pred_region
        // Predicated region
        $region45: #{tpu_custom_call.1} parent=43 // pred_check
          %p319 = pneg %p152
        $region46: #{tpu_custom_call.1} parent=43 // pred_check_branch
          %321 = sbr.rel (%p319) target = $region48
        $region47: #{tpu_custom_call.1} parent=43 // pred_region
          %s322 = sand.u32 %s25, 1
          %s323 = scalar_lea.sflag [#allocation7], %s322
          %s324 = sand.u32 %s142, 1
          %s325 = smul.addr %s324, 256
          %s326 = scalar_lea.vmem [#allocation11], %s325
          %s327 = sld [smem:[#allocation5 + %s25]]
          %s329 = ssub.s32 4096, 4096
          %330 = vsyncadd %s323, %s329
          %s331 = smul.addr %s327, 32
          %s332 = smul.addr %s331, 128
          %s333 = scalar_lea.hbm %s6, %s332
          %s334 = sshll.u32 %s326, 4
          %s335 = int_to_ptr.vmem [resolvable:$true] %s334
          %340 = dma.hbm_to_vmem [thread:$0]  %s333, 4096, %s335, %s323, 128, 128, 8
        $region48: #{tpu_custom_call.1} parent=43 // pred_fallthru
          _
        // Predicated region
        $region49: #{tpu_custom_call.1} parent=43 // pred_check
          %p341 = pneg %p180
        $region50: #{tpu_custom_call.1} parent=43 // pred_check_branch
          %343 = sbr.rel (%p341) target = $region52
        $region51: #{tpu_custom_call.1} parent=43 // pred_region
          %s344 = sld [smem:[#allocation5 + %s25]]
          %p345 = scmp.lt.s32.totalorder %s344, 6
          %s346 = scalar_select %p345, %s344, 6
          %s347 = scalar_lea.vmem %s7, %s346
          %s348 = sld [smem:[#allocation5 + %s25]]
        $region52: #{tpu_custom_call.1} parent=43 // pred_fallthru
          _
      $region44: #{tpu_custom_call.1} parent=5 // pred_fallthru
        _
      %p349 = scmp.le.s32.totalorder 1, %s25
      %p350 = scmp.lt.s32.totalorder %s25, 5
      %p351 = pnand %p349, %p350
      %p352 = pneg %p351
      // Predicated region
      $region53: #{tpu_custom_call.1} parent=5 // pred_check
        _
      $region54: #{tpu_custom_call.1} parent=5 // pred_check_branch
        %354 = sbr.rel (%p351) target = $region56
      $region55: #{tpu_custom_call.1} parent=5 // pred_region
        %s355 = ssub.s32 %s25, 1
        // Predicated region
        $region57: #{tpu_custom_call.1} parent=55 // pred_check
          %p356 = pneg %p46
        $region58: #{tpu_custom_call.1} parent=55 // pred_check_branch
          %358 = sbr.rel (%p356) target = $region60
        $region59: #{tpu_custom_call.1} parent=55 // pred_region
          %359 = dma.done [#allocation7], 512
        $region60: #{tpu_custom_call.1} parent=55 // pred_fallthru
          _
        // Predicated region
        $region61: #{tpu_custom_call.1} parent=55 // pred_check
          %p360 = pneg %p109
        $region62: #{tpu_custom_call.1} parent=55 // pred_check_branch
          %362 = sbr.rel (%p360) target = $region64
        $region63: #{tpu_custom_call.1} parent=55 // pred_region
          %363 = dma.done [#allocation10], 4096
        $region64: #{tpu_custom_call.1} parent=55 // pred_fallthru
          _
        %s364 = sand.u32 %s30, 1
        %s365 = scalar_lea.sflag [#allocation7], %s364
        %s366 = sand.u32 %s145, 1
        %s367 = smul.addr %s366, 256
        %s368 = scalar_lea.vmem [#allocation11], %s367
        // Predicated region
        $region65: #{tpu_custom_call.1} parent=55 // pred_check
          %p369 = pneg %p158
        $region66: #{tpu_custom_call.1} parent=55 // pred_check_branch
          %371 = sbr.rel (%p369) target = $region68
        $region67: #{tpu_custom_call.1} parent=55 // pred_region
          %372 = dma.done %s365, 4096
        $region68: #{tpu_custom_call.1} parent=55 // pred_fallthru
          _
        // Predicated region
        $region69: #{tpu_custom_call.1} parent=55 // pred_check
          %p373 = pneg %p207
        $region70: #{tpu_custom_call.1} parent=55 // pred_check_branch
          %375 = sbr.rel (%p373) target = $region72
        $region71: #{tpu_custom_call.1} parent=55 // pred_region
          %376 = dma.done [#allocation10], 2048
        $region72: #{tpu_custom_call.1} parent=55 // pred_fallthru
          _
        %p377 = pneg %p46
        %p378 = pneg %p43
        %p379 = pneg %p67
        %p380 = pneg %p64
        %p381 = pneg %p88
        %p382 = pneg %p85
        %p383 = pneg %p109
        %p384 = pneg %p106
        %p385 = pneg %p130
        %p386 = pneg %p127
        %s387 = sand.u32 %s30, 1
        %s388 = scalar_lea.sflag [#allocation7], %s387
        %s389 = sand.u32 %s145, 1
        %s390 = smul.addr %s389, 256
        %s391 = scalar_lea.vmem [#allocation11], %s390
        %p392 = pneg %p158
        %p393 = pneg %p155
        %s394 = sld [smem:[#allocation5 + %s30]]
        %p395 = scmp.lt.s32.totalorder %s394, 6
        %s396 = scalar_select %p395, %s394, 6
        %s397 = scalar_lea.vmem %s7, %s396
        %p398 = pneg %p186
        %p399 = pneg %p183
        %p400 = pneg %p207
        %p401 = pneg %p204
        %p402 = pneg %p228
        %p403 = pneg %p225
        %p404 = pneg %p249
        %p405 = pneg %p246
        %s406 = sld [smem:[#allocation5 + %s30]]
        %s407 = sld [smem:[#allocation5 + %s30]]
        %p408 = scmp.lt.s32.totalorder %s407, 6
        %s409 = scalar_select %p408, %s407, 6
        %s410 = scalar_lea.vmem %s7, %s409
        %s411 = sld [smem:[#allocation5 + %s30]]
        %p412 = scmp.eq.s32.totalorder %s30, 0
        // Predicated region
        $region73: #{tpu_custom_call.1} parent=55 // pred_check
          %p413 = pneg %p412
        $region74: #{tpu_custom_call.1} parent=55 // pred_check_branch
          %415 = sbr.rel (%p413) target = $region76
        $region75: #{tpu_custom_call.1} parent=55 // pred_region
          %v416 = vld [vmem:[#allocation6] sm:$0xff]
          %v417 = vld [vmem:[#allocation6 + $0x8] sm:$0xff]
          %v418 = vld [vmem:[#allocation6 + $0x10] sm:$0xf]
          %v419 = vld [vmem:[#allocation6 + $0x18] sm:$0xf]
          %v420 = vld [vmem:[#allocation9] sm:$0xff]
          %v421 = vld [vmem:[#allocation9 + $0x8] sm:$0xff]
          %v422 = vld [vmem:[#allocation9 + $0x10] sm:$0xff]
          %v423 = vld [vmem:[#allocation9 + $0x18] sm:$0xff]
          %v424 = vld [vmem:[#allocation9 + $0x20] sm:$0xff]
          %v425 = vld [vmem:[#allocation9 + $0x28] sm:$0xff]
          %v426 = vld [vmem:[#allocation9 + $0x30] sm:$0xff]
          %v427 = vld [vmem:[#allocation9 + $0x38] sm:$0xff]
          %v428 = vld [vmem:[#allocation9 + $0x40] sm:$0xff]
          %v429 = vld [vmem:[#allocation9 + $0x48] sm:$0xff]
          %v430 = vld [vmem:[#allocation9 + $0x50] sm:$0xff]
          %v431 = vld [vmem:[#allocation9 + $0x58] sm:$0xff]
          %v432 = vld [vmem:[#allocation9 + $0x60] sm:$0xff]
          %v433 = vld [vmem:[#allocation9 + $0x68] sm:$0xff]
          %v434 = vld [vmem:[#allocation9 + $0x70] sm:$0xff]
          %v435 = vld [vmem:[#allocation9 + $0x78] sm:$0xff]
          %v436 = vld [vmem:[#allocation9 + $0x80] sm:$0xff]
          %v437 = vld [vmem:[#allocation9 + $0x88] sm:$0xff]
          %v438 = vld [vmem:[#allocation9 + $0x90] sm:$0xff]
          %v439 = vld [vmem:[#allocation9 + $0x98] sm:$0xff]
          %v440 = vld [vmem:[#allocation9 + $0xa0] sm:$0xff]
          %v441 = vld [vmem:[#allocation9 + $0xa8] sm:$0xff]
          %v442 = vld [vmem:[#allocation9 + $0xb0] sm:$0xff]
          %v443 = vld [vmem:[#allocation9 + $0xb8] sm:$0xff]
          %v444 = vld [vmem:[#allocation9 + $0xc0] sm:$0xff]
          %v445 = vld [vmem:[#allocation9 + $0xc8] sm:$0xff]
          %v446 = vld [vmem:[#allocation9 + $0xd0] sm:$0xff]
          %v447 = vld [vmem:[#allocation9 + $0xd8] sm:$0xff]
          %v448 = vld [vmem:[#allocation9 + $0xe0] sm:$0xff]
          %v449 = vld [vmem:[#allocation9 + $0xe8] sm:$0xff]
          %v450 = vld [vmem:[#allocation9 + $0xf0] sm:$0xff]
          %v451 = vld [vmem:[#allocation9 + $0xf8] sm:$0xff]
          %v452 = vld [vmem:[%s5] sm:$0x1]
          %v454 = vlaneseq
          %v455 = vshrl.u32 %v454, 7
          %v456 = vsub.s32 0, %v455
          %v457 = vrot.slane %v452, %v456
          %459 = vmatprep.subr.mxu0 0.0
          %460 = vmatpush1.msra.mxu0 %v420
          %461 = vmatprep.subr.mxu0 0.0
          %462 = vmatpush1.msra.mxu0 %v421
          %463 = vmatprep.subr.mxu0 0.0
          %464 = vmatpush1.msra.mxu0 %v422
          %465 = vmatprep.subr.mxu0 0.0
          %466 = vmatpush1.msra.mxu0 %v423
          %467 = vmatprep.subr.mxu0 0.0
          %468 = vmatpush1.msra.mxu0 %v424
          %469 = vmatprep.subr.mxu0 0.0
          %470 = vmatpush1.msra.mxu0 %v425
          %471 = vmatprep.subr.mxu0 0.0
          %472 = vmatpush1.msra.mxu0 %v426
          %473 = vmatprep.subr.mxu0 0.0
          %474 = vmatpush1.msra.mxu0 %v427
          %475 = vmatprep.subr.mxu0 0.0
          %476 = vmatpush1.msra.mxu0 %v428
          %477 = vmatprep.subr.mxu0 0.0
          %478 = vmatpush1.msra.mxu0 %v429
          %479 = vmatprep.subr.mxu0 0.0
          %480 = vmatpush1.msra.mxu0 %v430
          %481 = vmatprep.subr.mxu0 0.0
          %482 = vmatpush1.msra.mxu0 %v431
          %483 = vmatprep.subr.mxu0 0.0
          %484 = vmatpush1.msra.mxu0 %v432
          %485 = vmatprep.subr.mxu0 0.0
          %486 = vmatpush1.msra.mxu0 %v433
          %487 = vmatprep.subr.mxu0 0.0
          %488 = vmatpush1.msra.mxu0 %v434
          %489 = vmatprep.subr.mxu0 0.0
          %490 = vmatpush1.msra.mxu0 %v435
          %491 = vmatprep.subr.mxu0 0.0
          %492 = vmatpush1.msra.mxu0 %v436
          %493 = vmatprep.subr.mxu0 0.0
          %494 = vmatpush1.msra.mxu0 %v437
          %495 = vmatprep.subr.mxu0 0.0
          %496 = vmatpush1.msra.mxu0 %v438
          %497 = vmatprep.subr.mxu0 0.0
          %498 = vmatpush1.msra.mxu0 %v439
          %499 = vmatprep.subr.mxu0 0.0
          %500 = vmatpush1.msra.mxu0 %v440
          %501 = vmatprep.subr.mxu0 0.0
          %502 = vmatpush1.msra.mxu0 %v441
          %503 = vmatprep.subr.mxu0 0.0
          %504 = vmatpush1.msra.mxu0 %v442
          %505 = vmatprep.subr.mxu0 0.0
          %506 = vmatpush1.msra.mxu0 %v443
          %507 = vmatprep.subr.mxu0 0.0
          %508 = vmatpush1.msra.mxu0 %v444
          %509 = vmatprep.subr.mxu0 0.0
          %510 = vmatpush1.msra.mxu0 %v445
          %511 = vmatprep.subr.mxu0 0.0
          %512 = vmatpush1.msra.mxu0 %v446
          %513 = vmatprep.subr.mxu0 0.0
          %514 = vmatpush1.msra.mxu0 %v447
          %515 = vmatprep.subr.mxu0 0.0
          %516 = vmatpush1.msra.mxu0 %v448
          %517 = vmatprep.subr.mxu0 0.0
          %518 = vmatpush1.msra.mxu0 %v449
          %519 = vmatprep.subr.mxu0 0.0
          %520 = vmatpush1.msra.mxu0 %v450
          %521 = vmatprep.subr.mxu0 0.0
          %522 = vmatpush1.msra.mxu0 %v451
          %523 = vmatprep.mubr.f32.mxu0 %v417
          %524 = vmatmul.mubr.f32.gmra.mrb[0].mxu0 %v416
          %v525 = vpop.f32.mrb[0].mxu0
          %v526 = vadd.f32 %v457, %v525
          %v527 = vpop.f32.mrb[0].mxu0
          %528 = vmatprep.mubr.f32.mxu0 %v419
          %529 = vmatmul.mubr.f32.gmra.mrb[0].mxu0 %v418
          %v530 = vpop.f32.mrb[0].mxu0
          %v531 = vadd.f32 %v457, %v530
          %v532 = vpop.f32.mrb[0].mxu0
          %533 = vdwg.mxu0
          %v534 = vmax.f32 %v526, 0.0
          %v535 = vmax.f32 %v531, 0.0
          %v536 = vld [vmem:[%s3] sm:$0xf]
          %vm537 = vcmp.eq.s32.totalorder %v536, 1
          %v539 = vrot.slane %v534, 4
          %v541 = vmul.f32 %v534, %v539
          %v542 = vsel %vm537, 1, 0
          %543 = vset.pattern.permute.xlu0 0
          %544 = vperm.xlu0 %543, %v542
          %v545 = vpop.permute.xlu0 %544
          %vm546 = vcmp.eq.s32.totalorder %v545, 1
          %v547 = vsel %vm546, %v541, %v534
          %v549 = vrot.slane %v535, 4
          %v551 = vmul.f32 %v534, %v549
          %v553 = vrot.slane %v551, 4
          %v555 = vsel %vm546, %v553, %v539
          %v558 = vcombine.low %v547, %v555
          %560 = vst [vmem:[#allocation2] sm:$0xff] %v558
          %561 = vst [vmem:[#allocation3] sm:$0xf] 0.0
        $region76: #{tpu_custom_call.1} parent=55 // pred_fallthru
          _
        %v562 = vld [vmem:[#allocation2] sm:$0xff]
        %v563 = vld [vmem:[%s368] sm:$0xff]
        %v564 = vld [vmem:[%s368 + $0x8] sm:$0xff]
        %v565 = vld [vmem:[%s368 + $0x10] sm:$0xff]
        %v566 = vld [vmem:[%s368 + $0x18] sm:$0xff]
        %v567 = vld [vmem:[%s368 + $0x20] sm:$0xff]
        %v568 = vld [vmem:[%s368 + $0x28] sm:$0xff]
        %v569 = vld [vmem:[%s368 + $0x30] sm:$0xff]
        %v570 = vld [vmem:[%s368 + $0x38] sm:$0xff]
        %v571 = vld [vmem:[%s368 + $0x40] sm:$0xff]
        %v572 = vld [vmem:[%s368 + $0x48] sm:$0xff]
        %v573 = vld [vmem:[%s368 + $0x50] sm:$0xff]
        %v574 = vld [vmem:[%s368 + $0x58] sm:$0xff]
        %v575 = vld [vmem:[%s368 + $0x60] sm:$0xff]
        %v576 = vld [vmem:[%s368 + $0x68] sm:$0xff]
        %v577 = vld [vmem:[%s368 + $0x70] sm:$0xff]
        %v578 = vld [vmem:[%s368 + $0x78] sm:$0xff]
        %v579 = vld [vmem:[%s368 + $0x80] sm:$0xff]
        %v580 = vld [vmem:[%s368 + $0x88] sm:$0xff]
        %v581 = vld [vmem:[%s368 + $0x90] sm:$0xff]
        %v582 = vld [vmem:[%s368 + $0x98] sm:$0xff]
        %v583 = vld [vmem:[%s368 + $0xa0] sm:$0xff]
        %v584 = vld [vmem:[%s368 + $0xa8] sm:$0xff]
        %v585 = vld [vmem:[%s368 + $0xb0] sm:$0xff]
        %v586 = vld [vmem:[%s368 + $0xb8] sm:$0xff]
        %v587 = vld [vmem:[%s368 + $0xc0] sm:$0xff]
        %v588 = vld [vmem:[%s368 + $0xc8] sm:$0xff]
        %v589 = vld [vmem:[%s368 + $0xd0] sm:$0xff]
        %v590 = vld [vmem:[%s368 + $0xd8] sm:$0xff]
        %v591 = vld [vmem:[%s368 + $0xe0] sm:$0xff]
        %v592 = vld [vmem:[%s368 + $0xe8] sm:$0xff]
        %v593 = vld [vmem:[%s368 + $0xf0] sm:$0xff]
        %v594 = vld [vmem:[%s368 + $0xf8] sm:$0xff]
        %v595 = vld [vmem:[%s410] sm:$0x1]
        %v597 = vlaneseq
        %v598 = vshrl.u32 %v597, 7
        %v599 = vsub.s32 0, %v598
        %v600 = vrot.slane %v595, %v599
        %v603 = vcombine.high %v562, %v562
        %605 = vmatprep.subr.mxu0 0.0
        %606 = vmatpush1.msra.mxu0 %v563
        %607 = vmatprep.subr.mxu0 0.0
        %608 = vmatpush1.msra.mxu0 %v564
        %609 = vmatprep.subr.mxu0 0.0
        %610 = vmatpush1.msra.mxu0 %v565
        %611 = vmatprep.subr.mxu0 0.0
        %612 = vmatpush1.msra.mxu0 %v566
        %613 = vmatprep.subr.mxu0 0.0
        %614 = vmatpush1.msra.mxu0 %v567
        %615 = vmatprep.subr.mxu0 0.0
        %616 = vmatpush1.msra.mxu0 %v568
        %617 = vmatprep.subr.mxu0 0.0
        %618 = vmatpush1.msra.mxu0 %v569
        %619 = vmatprep.subr.mxu0 0.0
        %620 = vmatpush1.msra.mxu0 %v570
        %621 = vmatprep.subr.mxu0 0.0
        %622 = vmatpush1.msra.mxu0 %v571
        %623 = vmatprep.subr.mxu0 0.0
        %624 = vmatpush1.msra.mxu0 %v572
        %625 = vmatprep.subr.mxu0 0.0
        %626 = vmatpush1.msra.mxu0 %v573
        %627 = vmatprep.subr.mxu0 0.0
        %628 = vmatpush1.msra.mxu0 %v574
        %629 = vmatprep.subr.mxu0 0.0
        %630 = vmatpush1.msra.mxu0 %v575
        %631 = vmatprep.subr.mxu0 0.0
        %632 = vmatpush1.msra.mxu0 %v576
        %633 = vmatprep.subr.mxu0 0.0
        %634 = vmatpush1.msra.mxu0 %v577
        %635 = vmatprep.subr.mxu0 0.0
        %636 = vmatpush1.msra.mxu0 %v578
        %637 = vmatprep.subr.mxu0 0.0
        %638 = vmatpush1.msra.mxu0 %v579
        %639 = vmatprep.subr.mxu0 0.0
        %640 = vmatpush1.msra.mxu0 %v580
        %641 = vmatprep.subr.mxu0 0.0
        %642 = vmatpush1.msra.mxu0 %v581
        %643 = vmatprep.subr.mxu0 0.0
        %644 = vmatpush1.msra.mxu0 %v582
        %645 = vmatprep.subr.mxu0 0.0
        %646 = vmatpush1.msra.mxu0 %v583
        %647 = vmatprep.subr.mxu0 0.0
        %648 = vmatpush1.msra.mxu0 %v584
        %649 = vmatprep.subr.mxu0 0.0
        %650 = vmatpush1.msra.mxu0 %v585
        %651 = vmatprep.subr.mxu0 0.0
        %652 = vmatpush1.msra.mxu0 %v586
        %653 = vmatprep.subr.mxu0 0.0
        %654 = vmatpush1.msra.mxu0 %v587
        %655 = vmatprep.subr.mxu0 0.0
        %656 = vmatpush1.msra.mxu0 %v588
        %657 = vmatprep.subr.mxu0 0.0
        %658 = vmatpush1.msra.mxu0 %v589
        %659 = vmatprep.subr.mxu0 0.0
        %660 = vmatpush1.msra.mxu0 %v590
        %661 = vmatprep.subr.mxu0 0.0
        %662 = vmatpush1.msra.mxu0 %v591
        %663 = vmatprep.subr.mxu0 0.0
        %664 = vmatpush1.msra.mxu0 %v592
        %665 = vmatprep.subr.mxu0 0.0
        %666 = vmatpush1.msra.mxu0 %v593
        %667 = vmatprep.subr.mxu0 0.0
        %668 = vmatpush1.msra.mxu0 %v594
        %669 = vmatprep.mubr.f32.mxu0 %v603
        %670 = vmatmul.mubr.f32.gmra.mrb[0].mxu0 %v562
        %v671 = vpop.f32.mrb[0].mxu0
        %v672 = vadd.f32 %v600, %v671
        %v673 = vpop.f32.mrb[0].mxu0
        %674 = vdwg.mxu0
        %v675 = vmax.f32 %v672, 0.0
        %v676 = vld [vmem:[%s2] sm:$0xf]
        %v677 = vstv %s30
        %vm678 = vcmp.eq.s32.totalorder %v676, %v677
        %v679 = vld [vmem:[#allocation3] sm:$0xf]
        %v680 = vsel %vm678, 1, 0
        %681 = vset.pattern.permute.xlu0 0
        %682 = vperm.xlu0 %681, %v680
        %v683 = vpop.permute.xlu0 %682
        %vm684 = vcmp.eq.s32.totalorder %v683, 1
        %v685 = vsel %vm684, %v675, 0.0
        %v686 = vadd.f32 %v679, %v685
        %687 = vst [vmem:[#allocation3] sm:$0xf] %v686
        %p688 = scmp.eq.s32.totalorder %s30, 3
        // Predicated region
        $region77: #{tpu_custom_call.1} parent=55 // pred_check
          %p689 = pneg %p688
        $region78: #{tpu_custom_call.1} parent=55 // pred_check_branch
          %691 = sbr.rel (%p689) target = $region80
        $region79: #{tpu_custom_call.1} parent=55 // pred_region
          %v692 = vld [vmem:[#allocation3] sm:$0xf]
          %v693 = vld [vmem:[#allocation12] sm:$0xff]
          %v694 = vld [vmem:[#allocation12 + $0x8] sm:$0xff]
          %v695 = vld [vmem:[#allocation12 + $0x10] sm:$0xff]
          %v696 = vld [vmem:[#allocation12 + $0x18] sm:$0xff]
          %v697 = vld [vmem:[#allocation12 + $0x20] sm:$0xff]
          %v698 = vld [vmem:[#allocation12 + $0x28] sm:$0xff]
          %v699 = vld [vmem:[#allocation12 + $0x30] sm:$0xff]
          %v700 = vld [vmem:[#allocation12 + $0x38] sm:$0xff]
          %v701 = vld [vmem:[#allocation12 + $0x40] sm:$0xff]
          %v702 = vld [vmem:[#allocation12 + $0x48] sm:$0xff]
          %v703 = vld [vmem:[#allocation12 + $0x50] sm:$0xff]
          %v704 = vld [vmem:[#allocation12 + $0x58] sm:$0xff]
          %v705 = vld [vmem:[#allocation12 + $0x60] sm:$0xff]
          %v706 = vld [vmem:[#allocation12 + $0x68] sm:$0xff]
          %v707 = vld [vmem:[#allocation12 + $0x70] sm:$0xff]
          %v708 = vld [vmem:[#allocation12 + $0x78] sm:$0xff]
          %v709 = vld [vmem:[%s9] sm:$0x1]
          %v711 = vlaneseq
          %v712 = vshrl.u32 %v711, 7
          %v713 = vsub.s32 0, %v712
          %v714 = vrot.slane %v709, %v713
          %716 = vmatprep.subr.mxu0 0.0
          %717 = vmatpush1.msra.mxu0 %v693
          %718 = vmatprep.subr.mxu0 0.0
          %719 = vmatpush1.msra.mxu0 %v694
          %720 = vmatprep.subr.mxu0 0.0
          %721 = vmatpush1.msra.mxu0 %v695
          %722 = vmatprep.subr.mxu0 0.0
          %723 = vmatpush1.msra.mxu0 %v696
          %724 = vmatprep.subr.mxu0 0.0
          %725 = vmatpush1.msra.mxu0 %v697
          %726 = vmatprep.subr.mxu0 0.0
          %727 = vmatpush1.msra.mxu0 %v698
          %728 = vmatprep.subr.mxu0 0.0
          %729 = vmatpush1.msra.mxu0 %v699
          %730 = vmatprep.subr.mxu0 0.0
          %731 = vmatpush1.msra.mxu0 %v700
          %732 = vmatprep.subr.mxu0 0.0
          %733 = vmatpush1.msra.mxu0 %v701
          %734 = vmatprep.subr.mxu0 0.0
          %735 = vmatpush1.msra.mxu0 %v702
          %736 = vmatprep.subr.mxu0 0.0
          %737 = vmatpush1.msra.mxu0 %v703
          %738 = vmatprep.subr.mxu0 0.0
          %739 = vmatpush1.msra.mxu0 %v704
          %740 = vmatprep.subr.mxu0 0.0
          %741 = vmatpush1.msra.mxu0 %v705
          %742 = vmatprep.subr.mxu0 0.0
          %743 = vmatpush1.msra.mxu0 %v706
          %744 = vmatprep.subr.mxu0 0.0
          %745 = vmatpush1.msra.mxu0 %v707
          %746 = vmatprep.subr.mxu0 0.0
          %747 = vmatpush1.msra.mxu0 %v708
          %748 = vmatprep.subr.mxu0 0.0
          %749 = vmatpush1.msra.mxu0 0.0
          %750 = vmatprep.subr.mxu0 0.0
          %751 = vmatpush1.msra.mxu0 0.0
          %752 = vmatprep.subr.mxu0 0.0
          %753 = vmatpush1.msra.mxu0 0.0
          %754 = vmatprep.subr.mxu0 0.0
          %755 = vmatpush1.msra.mxu0 0.0
          %756 = vmatprep.subr.mxu0 0.0
          %757 = vmatpush1.msra.mxu0 0.0
          %758 = vmatprep.subr.mxu0 0.0
          %759 = vmatpush1.msra.mxu0 0.0
          %760 = vmatprep.subr.mxu0 0.0
          %761 = vmatpush1.msra.mxu0 0.0
          %762 = vmatprep.subr.mxu0 0.0
          %763 = vmatpush1.msra.mxu0 0.0
          %764 = vmatprep.subr.mxu0 0.0
          %765 = vmatpush1.msra.mxu0 0.0
          %766 = vmatprep.subr.mxu0 0.0
          %767 = vmatpush1.msra.mxu0 0.0
          %768 = vmatprep.subr.mxu0 0.0
          %769 = vmatpush1.msra.mxu0 0.0
          %770 = vmatprep.subr.mxu0 0.0
          %771 = vmatpush1.msra.mxu0 0.0
          %772 = vmatprep.subr.mxu0 0.0
          %773 = vmatpush1.msra.mxu0 0.0
          %774 = vmatprep.subr.mxu0 0.0
          %775 = vmatpush1.msra.mxu0 0.0
          %776 = vmatprep.subr.mxu0 0.0
          %777 = vmatpush1.msra.mxu0 0.0
          %778 = vmatprep.subr.mxu0 0.0
          %779 = vmatpush1.msra.mxu0 0.0
          %780 = vmatprep.mubr.f32.mxu0 0.0
          %781 = vmatmul.mubr.f32.gmra.mrb[0].mxu0 %v692
          %v782 = vpop.f32.mrb[0].mxu0
          %v783 = vadd.f32 %v714, %v782
          %v784 = vpop.f32.mrb[0].mxu0
          %785 = vdwg.mxu0
          %786 = vst [vmem:[#allocation13] sm:$0xf] %v783
        $region80: #{tpu_custom_call.1} parent=55 // pred_fallthru
          _
        // Predicated region
        $region81: #{tpu_custom_call.1} parent=55 // pred_check
          %p787 = pneg %p246
        $region82: #{tpu_custom_call.1} parent=55 // pred_check_branch
          %789 = sbr.rel (%p787) target = $region84
        $region83: #{tpu_custom_call.1} parent=55 // pred_region
          %s791 = ssub.s32 64, 64
          %792 = vsyncadd [#allocation8], %s791
          %s794 = sshll.u32 [#allocation13], 4
          %s795 = int_to_ptr.vmem [resolvable:$true] %s794
          %797 = dma.vmem_to_hbm [thread:$0]  %s795, 64, %s10, [#allocation8]
        $region84: #{tpu_custom_call.1} parent=55 // pred_fallthru
          _
        // Predicated region
        $region85: #{tpu_custom_call.1} parent=55 // pred_check
          %p798 = pneg %p246
        $region86: #{tpu_custom_call.1} parent=55 // pred_check_branch
          %800 = sbr.rel (%p798) target = $region88
        $region87: #{tpu_custom_call.1} parent=55 // pred_region
          %801 = dma.done [#allocation8], 64
        $region88: #{tpu_custom_call.1} parent=55 // pred_fallthru
          _
      $region56: #{tpu_custom_call.1} parent=5 // pred_fallthru
        _
      %p802 = scmp.le.s32.totalorder 2, %s25
      // Predicated region
      $region89: #{tpu_custom_call.1} parent=5 // pred_check
        %p803 = pneg %p802
      $region90: #{tpu_custom_call.1} parent=5 // pred_check_branch
        %805 = sbr.rel (%p803) target = $region92
      $region91: #{tpu_custom_call.1} parent=5 // pred_region
        %s806 = ssub.s32 %s25, 2
      $region92: #{tpu_custom_call.1} parent=5 // pred_fallthru
        _
    $region6: #{tpu_custom_call.1} parent=1 // loop_footer
      %s29 = sadd.s32 1, %s25
    $region7: #{tpu_custom_call.1} parent=1 // loop_footer_branch
      %24 = sbr.rel target = $region3
    $region8: #{tpu_custom_call.1} parent=1 // loop_exit
      _
    %807 = vsyncpa [#allocation7], 1
    %s808 = scalar_lea.sflag [#allocation7], 1
    %809 = vsyncpa %s808, 1
    %810 = vsyncpa [#allocation10], 1
    %811 = vsyncpa [#allocation8], 1
    %s812 = scalar_lea.sflag [#allocation8], 1
    %813 = vsyncpa %s812, 1

</llo_original>
